<compile_context>
chip_gen: v6e
topology: v6e:2x2x1
jax: 0.10.0
libtpu: 0.0.40
codegen_flags: <defaults>
</compile_context>

<pallas_src>
import numpy as np
import jax
import jax.numpy as jnp
from jax.experimental import pallas as pl
from jax.experimental.pallas import tpu as pltpu


def _round_up(x, m):
    return ((x + m - 1) // m) * m


# ----------------------------------------------------------------------------
# Kernel factory.
#   ids_ref : (R, ks_max) int32  -- token id at position r+dk, pre-offset by dk*Vp
#   t_ref   : (ks_max*Vp, W) f32 -- embedding-folded, tap-packed, ksize/gate-fused weights
#   b_ref   : (1, W) f32         -- fused bias [conv biases | gate biases]
#   o_ref   : (B, K) f32         -- max over time and over kernel sizes
# ----------------------------------------------------------------------------
def _make_gated_cnn_kernel(ksizes, B, L, K, Vp, ks_max, if_gate, R):
    n = len(ksizes)
    KV = ks_max * Vp
    nK = n * K

    def kernel(ids_ref, t_ref, b_ref, o_ref):
        # ---- one-hot "gather" over the tap-packed vocab axis (ids carry +dk*Vp) ----
        ids = ids_ref[...]                                           # (R, ks_max) i32
        col = jax.lax.broadcasted_iota(jnp.int32, (R, KV), 1)        # (R, KV)
        onehot = (col == ids[:, 0:1]).astype(jnp.float32)
        for dk in range(1, ks_max):
            onehot = onehot + (col == ids[:, dk:dk + 1]).astype(jnp.float32)

        # ---- embedding + all taps + all kernel sizes + gate pre-act: ONE matmul ----
        acc = jnp.dot(onehot, t_ref[...], preferred_element_type=jnp.float32)
        acc = acc + b_ref[...]                                       # (R, W)

        if if_gate:
            # split on the 128-lane vreg boundary: [conv_ks*] * sigmoid([gate_ks*])
            gated = acc[:, :nK] * jax.nn.sigmoid(acc[:, nK:])        # (R, nK)
        else:
            gated = acc                                              # (R, nK)

        # ---- per-batch time max via static slices (no iota / where / -inf) ----
        rows = []
        for b in range(B):
            m = None
            for i, ks in enumerate(ksizes):
                L_out = L - ks + 1
                g = gated[b * L: b * L + L_out, i * K:(i + 1) * K]   # static slice
                mi = jnp.max(g, axis=0, keepdims=True)               # (1, K) sublane reduce
                m = mi if m is None else jnp.maximum(m, mi)
            rows.append(m)

        # single store of the whole (B, K) result
        o_ref[...] = jnp.concatenate(rows, axis=0)

    return kernel


# ----------------------------------------------------------------------------
# Wrapper: weight folding + a single pallas_call for the whole forward pass.
# Parameters are in PyTorch layout: conv_ws[i]/gate_ws[i]: (K, E, ks_i); biases: (K,).
# ----------------------------------------------------------------------------
def gated_cnn_forward(token_ids, emb_table, conv_ws, conv_bs,
                      gate_ws=None, gate_bs=None, *, if_gate=True):
    B, L = token_ids.shape
    V, E = emb_table.shape
    ksizes = tuple(int(w.shape[2]) for w in conv_ws)
    K = int(conv_ws[0].shape[0])
    n = len(ksizes)
    ks_max = max(ksizes)
    Vp = _round_up(V, 8)
    KV = ks_max * Vp
    W = n * K * (2 if if_gate else 1)

    emb_p = jnp.pad(emb_table.astype(jnp.float32), ((0, Vp - V), (0, 0)))  # (Vp, E)

    # Fold the embedding into the conv and pack taps along the contraction axis:
    #   row (dk*Vp + v) of a group = emb_p[v] @ w[:, :, dk].T ; missing taps are zero.
    def fold(w):  # w: (K, E, ks) -- PyTorch Conv1d weight layout
        ks = int(w.shape[2])
        blocks = []
        for dk in range(ks_max):
            if dk < ks:
                blocks.append(jnp.dot(emb_p, w[:, :, dk].T))          # (Vp, K)
            else:
                blocks.append(jnp.zeros((Vp, K), jnp.float32))
        return jnp.concatenate(blocks, axis=0)                        # (KV, K)

    col_groups = [fold(w) for w in conv_ws]
    bias_groups = [b.reshape(1, K).astype(jnp.float32) for b in conv_bs]
    if if_gate:
        col_groups += [fold(w) for w in gate_ws]
        bias_groups += [b.reshape(1, K).astype(jnp.float32) for b in gate_bs]
    t_folded = jnp.concatenate(col_groups, axis=1).astype(jnp.float32)   # (KV, W)
    bias = jnp.concatenate(bias_groups, axis=1)                          # (1, W)

    # Flattened, tap-shifted token ids; batch-crossing rows are excluded later by the
    # static slices, and padded ids (=0) hit the zeroed embedding row.
    BL = B * L
    R = _round_up(BL, 8)
    ids_flat = jnp.pad(token_ids.reshape(-1).astype(jnp.int32),
                       (0, R + ks_max - 1 - BL))
    ids_mat = jnp.stack([ids_flat[dk:dk + R] + dk * Vp for dk in range(ks_max)],
                        axis=1)                                          # (R, ks_max)

    kernel = _make_gated_cnn_kernel(ksizes, B, L, K, Vp, ks_max, if_gate, R)

    flops = 2 * R * KV * W
    trans = R * n * K if if_gate else 0
    bytes_accessed = ids_mat.size * 4 + t_folded.size * 4 + bias.size * 4 + B * K * 4

    return pl.pallas_call(
        kernel,
        out_shape=jax.ShapeDtypeStruct((B, K), jnp.float32),
        grid=(1,),
        in_specs=[
            pl.BlockSpec((R, ks_max), lambda i: (0, 0)),
            pl.BlockSpec((KV, W), lambda i: (0, 0)),
            pl.BlockSpec((1, W), lambda i: (0, 0)),
        ],
        out_specs=pl.BlockSpec((B, K), lambda i: (0, 0)),
        compiler_params=pltpu.CompilerParams(dimension_semantics=("arbitrary",)),
        cost_estimate=pl.CostEstimate(flops=int(flops), transcendentals=int(trans),
                                      bytes_accessed=int(bytes_accessed)),
    )(ids_mat, t_folded, bias)


# ----------------------------------------------------------------------------
# Pure-JAX reference mirroring the PyTorch module (for a correctness check).
# ----------------------------------------------------------------------------
def _reference(token_ids, emb_table, conv_ws, conv_bs, gate_ws, gate_bs, if_gate=True):
    x = jnp.take(emb_table, token_ids, axis=0)            # (B, L, E)
    B, L, _ = x.shape

    def conv(wt, bt):                                     # wt: (K, E, ks), bt: (K,)
        K_, _, ks = wt.shape
        L_out = L - ks + 1
        acc = jnp.zeros((B, L_out, K_), jnp.float32) + bt.reshape(1, 1, K_)
        for dk in range(ks):
            acc = acc + jnp.einsum("ble,ke->blk", x[:, dk:dk + L_out, :], wt[:, :, dk])
        return acc

    outs = []
    for i in range(len(conv_ws)):
        c = conv(conv_ws[i], conv_bs[i])
        if if_gate:
            g = conv(gate_ws[i], gate_bs[i])
            y = c * jax.nn.sigmoid(g)
        else:
            y = c
        outs.append(jnp.max(y, axis=1))                   # (B, K)
    out = outs[0]
    for o in outs[1:]:
        out = jnp.maximum(out, o)
    return out


if __name__ == "__main__":
    # Module hyperparameters (small, consistent with Gated_CNN)
    num_nodes = 10
    time_horizon = 8
    max_length = time_horizon + 1          # L = 9
    embedding_size = 32                    # E
    num_kernels = 64                       # K
    kernel_sizes = [2, 3]                  # exercises the fused multi-size path
    if_gate = True
    batch = 4                              # B

    key = jax.random.PRNGKey(0)
    k_emb, k_ids, *k_params = jax.random.split(key, 2 + len(kernel_sizes))

    # Embedding table, padding_idx=0 zeroed (like nn.Embedding(padding_idx=0))
    emb_table = jax.random.normal(k_emb, (num_nodes + 1, embedding_size),
                                  dtype=jnp.float32) * 0.1
    emb_table = emb_table.at[0].set(0.0)

    # Conv / gate parameters in PyTorch Conv1d layout: weight (K, E, ks), bias (K,)
    conv_ws, conv_bs, gate_ws, gate_bs = [], [], [], []
    for i, ks in enumerate(kernel_sizes):
        kc_w, kc_b, kg_w, kg_b = jax.random.split(k_params[i], 4)
        conv_ws.append(jax.random.normal(kc_w, (num_kernels, embedding_size, ks),
                                         dtype=jnp.float32) * 0.05)
        conv_bs.append(jax.random.normal(kc_b, (num_kernels,), dtype=jnp.float32) * 0.05)
        gate_ws.append(jax.random.normal(kg_w, (num_kernels, embedding_size, ks),
                                         dtype=jnp.float32) * 0.05)
        gate_bs.append(jax.random.normal(kg_b, (num_kernels,), dtype=jnp.float32) * 0.05)

    # Token-id inputs: variable-length sequences padded with 0 to max_length.
    # (The PyTorch pad_sequence / time_indicator / [:-1] glue reduces to exactly this
    #  padded (B, max_length) int32 tensor.)
    k_len, k_tok = jax.random.split(k_ids)
    lengths = jax.random.randint(k_len, (batch,), 3, max_length + 1)
    tok = jax.random.randint(k_tok, (batch, max_length), 1, num_nodes + 1)
    pos = jnp.arange(max_length)[None, :]
    token_ids = jnp.where(pos < lengths[:, None], tok, 0).astype(jnp.int32)

    out = gated_cnn_forward(token_ids, emb_table, conv_ws, conv_bs,
                            gate_ws, gate_bs, if_gate=if_gate)
    out = jax.block_until_ready(out)

    ref = _reference(token_ids, emb_table, conv_ws, conv_bs, gate_ws, gate_bs, if_gate)
    assert out.shape == (batch, num_kernels)
    np.testing.assert_allclose(np.asarray(out), np.asarray(ref), rtol=1e-4, atol=1e-4)

    print("KERNEL_OK")
</pallas_src>

<mosaic_0001>
module attributes {stable_mosaic.version = 11 : i64} {
  func.func @kernel(%arg0: i32, %arg1: memref<40x3xi32, #tpu.memory_space<vmem>>, %arg2: memref<48x256xf32, #tpu.memory_space<vmem>>, %arg3: memref<1x256xf32, #tpu.memory_space<vmem>>, %arg4: memref<4x64xf32, #tpu.memory_space<vmem>>) attributes {dimension_semantics = [#tpu.dimension_semantics<arbitrary>], iteration_bounds = array<i64: 1>, scalar_prefetch = 0 : i64, scratch_operands = 0 : i64, tpu.core_type = #tpu.core_type<tc>, window_params = [{pipeline_mode = #tpu.pipeline_mode<synchronous>, transform_indices = @transform_0, window_bounds = array<i64: 40, 3>}, {pipeline_mode = #tpu.pipeline_mode<synchronous>, transform_indices = @transform_1, window_bounds = array<i64: 48, 256>}, {pipeline_mode = #tpu.pipeline_mode<synchronous>, transform_indices = @transform_2, window_bounds = array<i64: 1, 256>}, {pipeline_mode = #tpu.pipeline_mode<synchronous>, transform_indices = @transform_3, window_bounds = array<i64: 4, 64>}]} {
    %c0 = arith.constant 0 : index
    %c0_0 = arith.constant 0 : index
    %0 = vector.load %arg1[%c0, %c0_0] : memref<40x3xi32, #tpu.memory_space<vmem>>, vector<40x3xi32>
    %1 = tpu.iota {dimensions = array<i32: 1>} : vector<40x48xi32>
    %2 = vector.extract_strided_slice %0 {offsets = [0, 0], sizes = [40, 1], strides = [1, 1]} : vector<40x3xi32> to vector<40x1xi32>
    %3 = vector.broadcast %2 : vector<40x1xi32> to vector<40x48xi32>
    %4 = arith.cmpi eq, %1, %3 : vector<40x48xi32>
    %5 = arith.extui %4 : vector<40x48xi1> to vector<40x48xi32>
    %6 = arith.sitofp %5 : vector<40x48xi32> to vector<40x48xf32>
    %7 = vector.extract_strided_slice %0 {offsets = [0, 1], sizes = [40, 1], strides = [1, 1]} : vector<40x3xi32> to vector<40x1xi32>
    %8 = vector.broadcast %7 : vector<40x1xi32> to vector<40x48xi32>
    %9 = arith.cmpi eq, %1, %8 : vector<40x48xi32>
    %10 = arith.extui %9 : vector<40x48xi1> to vector<40x48xi32>
    %11 = arith.sitofp %10 : vector<40x48xi32> to vector<40x48xf32>
    %12 = arith.addf %6, %11 : vector<40x48xf32>
    %13 = vector.extract_strided_slice %0 {offsets = [0, 2], sizes = [40, 1], strides = [1, 1]} : vector<40x3xi32> to vector<40x1xi32>
    %14 = vector.broadcast %13 : vector<40x1xi32> to vector<40x48xi32>
    %15 = arith.cmpi eq, %1, %14 : vector<40x48xi32>
    %16 = arith.extui %15 : vector<40x48xi1> to vector<40x48xi32>
    %17 = arith.sitofp %16 : vector<40x48xi32> to vector<40x48xf32>
    %18 = arith.addf %12, %17 : vector<40x48xf32>
    %c0_1 = arith.constant 0 : index
    %c0_2 = arith.constant 0 : index
    %19 = vector.load %arg2[%c0_1, %c0_2] : memref<48x256xf32, #tpu.memory_space<vmem>>, vector<48x256xf32>
    %cst = arith.constant dense<0.000000e+00> : vector<40x256xf32>
    %20 = tpu.matmul %18, %19, %cst {dimension_numbers = #tpu.dot_dimension_numbers<[1], [0], [0], [1], [0, 0, 1, 1], [], []>} : vector<40x48xf32>, vector<48x256xf32>, vector<40x256xf32> -> vector<40x256xf32>
    %c0_3 = arith.constant 0 : index
    %c0_4 = arith.constant 0 : index
    %21 = vector.load %arg3[%c0_3, %c0_4] : memref<1x256xf32, #tpu.memory_space<vmem>>, vector<1x256xf32>
    %22 = vector.broadcast %21 : vector<1x256xf32> to vector<40x256xf32>
    %23 = arith.addf %20, %22 : vector<40x256xf32>
    %24 = vector.extract_strided_slice %23 {offsets = [0, 0], sizes = [40, 128], strides = [1, 1]} : vector<40x256xf32> to vector<40x128xf32>
    %25 = vector.extract_strided_slice %23 {offsets = [0, 128], sizes = [40, 128], strides = [1, 1]} : vector<40x256xf32> to vector<40x128xf32>
    %26 = arith.negf %25 : vector<40x128xf32>
    %27 = math.exp %26 : vector<40x128xf32>
    %cst_5 = arith.constant 1.000000e+00 : f32
    %28 = vector.broadcast %cst_5 : f32 to vector<40x128xf32>
    %29 = arith.addf %28, %27 : vector<40x128xf32>
    %30 = arith.divf %28, %29 : vector<40x128xf32>
    %31 = arith.mulf %24, %30 : vector<40x128xf32>
    %32 = vector.extract_strided_slice %31 {offsets = [0, 0], sizes = [8, 64], strides = [1, 1]} : vector<40x128xf32> to vector<8x64xf32>
    %cst_6 = arith.constant dense<0xFF800000> : vector<64xf32>
    %33 = vector.multi_reduction <maximumf>, %32, %cst_6 [0] : vector<8x64xf32> to vector<64xf32>
    %34 = vector.shape_cast %33 : vector<64xf32> to vector<1x64xf32>
    %35 = vector.extract_strided_slice %31 {offsets = [0, 64], sizes = [7, 64], strides = [1, 1]} : vector<40x128xf32> to vector<7x64xf32>
    %cst_7 = arith.constant dense<0xFF800000> : vector<64xf32>
    %36 = vector.multi_reduction <maximumf>, %35, %cst_7 [0] : vector<7x64xf32> to vector<64xf32>
    %37 = vector.shape_cast %36 : vector<64xf32> to vector<1x64xf32>
    %38 = arith.maximumf %34, %37 : vector<1x64xf32>
    %39 = vector.extract_strided_slice %31 {offsets = [9, 0], sizes = [8, 64], strides = [1, 1]} : vector<40x128xf32> to vector<8x64xf32>
    %cst_8 = arith.constant dense<0xFF800000> : vector<64xf32>
    %40 = vector.multi_reduction <maximumf>, %39, %cst_8 [0] : vector<8x64xf32> to vector<64xf32>
    %41 = vector.shape_cast %40 : vector<64xf32> to vector<1x64xf32>
    %42 = vector.extract_strided_slice %31 {offsets = [9, 64], sizes = [7, 64], strides = [1, 1]} : vector<40x128xf32> to vector<7x64xf32>
    %cst_9 = arith.constant dense<0xFF800000> : vector<64xf32>
    %43 = vector.multi_reduction <maximumf>, %42, %cst_9 [0] : vector<7x64xf32> to vector<64xf32>
    %44 = vector.shape_cast %43 : vector<64xf32> to vector<1x64xf32>
    %45 = arith.maximumf %41, %44 : vector<1x64xf32>
    %46 = vector.extract_strided_slice %31 {offsets = [18, 0], sizes = [8, 64], strides = [1, 1]} : vector<40x128xf32> to vector<8x64xf32>
    %cst_10 = arith.constant dense<0xFF800000> : vector<64xf32>
    %47 = vector.multi_reduction <maximumf>, %46, %cst_10 [0] : vector<8x64xf32> to vector<64xf32>
    %48 = vector.shape_cast %47 : vector<64xf32> to vector<1x64xf32>
    %49 = vector.extract_strided_slice %31 {offsets = [18, 64], sizes = [7, 64], strides = [1, 1]} : vector<40x128xf32> to vector<7x64xf32>
    %cst_11 = arith.constant dense<0xFF800000> : vector<64xf32>
    %50 = vector.multi_reduction <maximumf>, %49, %cst_11 [0] : vector<7x64xf32> to vector<64xf32>
    %51 = vector.shape_cast %50 : vector<64xf32> to vector<1x64xf32>
    %52 = arith.maximumf %48, %51 : vector<1x64xf32>
    %53 = vector.extract_strided_slice %31 {offsets = [27, 0], sizes = [8, 64], strides = [1, 1]} : vector<40x128xf32> to vector<8x64xf32>
    %cst_12 = arith.constant dense<0xFF800000> : vector<64xf32>
    %54 = vector.multi_reduction <maximumf>, %53, %cst_12 [0] : vector<8x64xf32> to vector<64xf32>
    %55 = vector.shape_cast %54 : vector<64xf32> to vector<1x64xf32>
    %56 = vector.extract_strided_slice %31 {offsets = [27, 64], sizes = [7, 64], strides = [1, 1]} : vector<40x128xf32> to vector<7x64xf32>
    %cst_13 = arith.constant dense<0xFF800000> : vector<64xf32>
    %57 = vector.multi_reduction <maximumf>, %56, %cst_13 [0] : vector<7x64xf32> to vector<64xf32>
    %58 = vector.shape_cast %57 : vector<64xf32> to vector<1x64xf32>
    %59 = arith.maximumf %55, %58 : vector<1x64xf32>
    %60 = tpu.concatenate %38, %45, %52, %59 in 0 : vector<1x64xf32>, vector<1x64xf32>, vector<1x64xf32>, vector<1x64xf32> -> vector<4x64xf32>
    %c0_14 = arith.constant 0 : index
    %c0_15 = arith.constant 0 : index
    %61 = vector.load %arg4[%c0_14, %c0_15] : memref<4x64xf32, #tpu.memory_space<vmem>>, vector<4x64xf32>
    tpu.vector_store %arg4[%c0_14, %c0_15], %60 {strides = array<i32>} : memref<4x64xf32, #tpu.memory_space<vmem>>, vector<4x64xf32>,
    return
  }
  func.func @transform_0(%arg0: i32) -> (i32, i32) {
    %c0_i32 = arith.constant 0 : i32
    %c0_i32_0 = arith.constant 0 : i32
    %c0_i32_1 = arith.constant 0 : i32
    return %c0_i32, %c0_i32_0 : i32, i32
  }
  func.func @transform_1(%arg0: i32) -> (i32, i32) {
    %c0_i32 = arith.constant 0 : i32
    %c0_i32_0 = arith.constant 0 : i32
    %c0_i32_1 = arith.constant 0 : i32
    return %c0_i32, %c0_i32_0 : i32, i32
  }
  func.func @transform_2(%arg0: i32) -> (i32, i32) {
    %c0_i32 = arith.constant 0 : i32
    %c0_i32_0 = arith.constant 0 : i32
    %c0_i32_1 = arith.constant 0 : i32
    return %c0_i32, %c0_i32_0 : i32, i32
  }
  func.func @transform_3(%arg0: i32) -> (i32, i32) {
    %c0_i32 = arith.constant 0 : i32
    %c0_i32_0 = arith.constant 0 : i32
    %c0_i32_1 = arith.constant 0 : i32
    return %c0_i32, %c0_i32_0 : i32, i32
  }
}

</mosaic_0001>

<llo_original>
// kernel: tpu_custom_call.1
$region0: #{tpu_custom_call.1}
  #allocation0 [shape = 'u32[]', space=smem, size = 0x4, offset = 0x4, fixed_abs, tag = 'smem constant byte address 0x4 - core index']
  #allocation1 [shape = 'u32[144,128]{1,0:T(1,128)}', space=vmem, size = 0x12000, scoped, tag = 'internal scratch']
  %s0 = inlined_call_operand.vmem [shape: s32[40,3], index: 0, kind: input, shape index: {}]
  %s1 = inlined_call_operand.hbm [shape: f32[48,256], index: 1, kind: input, shape index: {}]
  %s2 = inlined_call_operand.vmem [shape: f32[1,256], index: 2, kind: input, shape index: {}]
  %s3 = inlined_call_operand.hbm [shape: f32[4,64], index: 3, kind: output, shape index: {}]
  %s4 = sld [smem:[#allocation0]]
  $region26: #{tpu_custom_call.1} parent=0
    _
  %s6 = ssub.s32 1, %s4
  %s7 = scalar_select 0, %s6, %s4
  $region1: #{tpu_custom_call.1} parent=0
    #allocation2 [shape = 'u8[49152]{0}', space=vmem, size = 0xc000, scoped, tag = 'input window, operand 1, single buffered']
    #allocation3 [shape = 's32[1]{0}', space=sflag, size = 0x4, scoped, tag = 'scoped memory for tpu_custom_call.1']
    #allocation4 [shape = 's32[1]{0}', space=sflag, size = 0x4, scoped, tag = 'scoped memory for tpu_custom_call.1']
    #allocation5 [shape = 'u8[2048]{0}', space=vmem, size = 0x800, scoped, tag = 'output window, operand 0, single buffered']
    %8 = vsyncpa [#allocation3], 0
    %9 = vsyncpa [#allocation4], 0
    // Predicated region
    $region2: #{tpu_custom_call.1} parent=1 // pred_check
      _
    $region3: #{tpu_custom_call.1} parent=1 // pred_check_branch
      %11 = sbr.rel (0) target = $region5
    $region4: #{tpu_custom_call.1} parent=1 // pred_region
      _
    $region5: #{tpu_custom_call.1} parent=1 // pred_fallthru
      _
    // Predicated region
    $region6: #{tpu_custom_call.1} parent=1 // pred_check
      _
    $region7: #{tpu_custom_call.1} parent=1 // pred_check_branch
      %13 = sbr.rel (0) target = $region9
    $region8: #{tpu_custom_call.1} parent=1 // pred_region
      %s15 = ssub.s32 1536, 1536
      %16 = vsyncadd [#allocation3], %s15
      %s17 = sshll.u32 [#allocation2], 4
      %s18 = int_to_ptr.vmem [resolvable:$true] %s17
      %23 = dma.hbm_to_vmem [thread:$0]  %s1, 1536, %s18, [#allocation3], 256, 256, 16
    $region9: #{tpu_custom_call.1} parent=1 // pred_fallthru
      _
    // Predicated region
    $region10: #{tpu_custom_call.1} parent=1 // pred_check
      _
    $region11: #{tpu_custom_call.1} parent=1 // pred_check_branch
      %25 = sbr.rel (0) target = $region13
    $region12: #{tpu_custom_call.1} parent=1 // pred_region
      _
    $region13: #{tpu_custom_call.1} parent=1 // pred_fallthru
      _
    // Predicated region
    $region14: #{tpu_custom_call.1} parent=1 // pred_check
      _
    $region15: #{tpu_custom_call.1} parent=1 // pred_check_branch
      %27 = sbr.rel (0) target = $region17
    $region16: #{tpu_custom_call.1} parent=1 // pred_region
      %28 = dma.done [#allocation3], 1536
    $region17: #{tpu_custom_call.1} parent=1 // pred_fallthru
      _
    %v29 = vld [vmem:[%s0] sm:$0xff]
    %v30 = vld [vmem:[%s0 + $0x8] sm:$0xff]
    %v31 = vld [vmem:[%s0 + $0x10] sm:$0xff]
    %v32 = vld [vmem:[%s0 + $0x18] sm:$0xff]
    %v33 = vld [vmem:[%s0 + $0x20] sm:$0xff]
    %v34 = vlaneseq
    %v35 = vand.u32 %v34, 127
    %36 = vset.pattern.permute.xlu0 0
    %37 = vperm.xlu0 %36, %v29
    %v38 = vpop.permute.xlu0 %37
    %39 = vset.pattern.permute.xlu0 0
    %40 = vperm.xlu0 %39, %v30
    %v41 = vpop.permute.xlu0 %40
    %42 = vset.pattern.permute.xlu0 0
    %43 = vperm.xlu0 %42, %v31
    %v44 = vpop.permute.xlu0 %43
    %45 = vset.pattern.permute.xlu0 0
    %46 = vperm.xlu0 %45, %v32
    %v47 = vpop.permute.xlu0 %46
    %48 = vset.pattern.permute.xlu0 0
    %49 = vperm.xlu0 %48, %v33
    %v50 = vpop.permute.xlu0 %49
    %vm51 = vcmp.eq.s32.totalorder %v35, %v38
    %vm52 = vcmp.eq.s32.totalorder %v35, %v41
    %vm53 = vcmp.eq.s32.totalorder %v35, %v44
    %vm54 = vcmp.eq.s32.totalorder %v35, %v47
    %vm55 = vcmp.eq.s32.totalorder %v35, %v50
    %v56 = vsel %vm51, 1, 0
    %v57 = vsel %vm52, 1, 0
    %v58 = vsel %vm53, 1, 0
    %v59 = vsel %vm54, 1, 0
    %v60 = vsel %vm55, 1, 0
    %v61 = vcvt.s32.f32 %v56
    %v62 = vcvt.s32.f32 %v57
    %v63 = vcvt.s32.f32 %v58
    %v64 = vcvt.s32.f32 %v59
    %v65 = vcvt.s32.f32 %v60
    %66 = vset.pattern.permute.xlu0 1
    %67 = vperm.xlu0 %66, %v29
    %v68 = vpop.permute.xlu0 %67
    %69 = vset.pattern.permute.xlu0 1
    %70 = vperm.xlu0 %69, %v30
    %v71 = vpop.permute.xlu0 %70
    %72 = vset.pattern.permute.xlu0 1
    %73 = vperm.xlu0 %72, %v31
    %v74 = vpop.permute.xlu0 %73
    %75 = vset.pattern.permute.xlu0 1
    %76 = vperm.xlu0 %75, %v32
    %v77 = vpop.permute.xlu0 %76
    %78 = vset.pattern.permute.xlu0 1
    %79 = vperm.xlu0 %78, %v33
    %v80 = vpop.permute.xlu0 %79
    %vm81 = vcmp.eq.s32.totalorder %v35, %v68
    %vm82 = vcmp.eq.s32.totalorder %v35, %v71
    %vm83 = vcmp.eq.s32.totalorder %v35, %v74
    %vm84 = vcmp.eq.s32.totalorder %v35, %v77
    %vm85 = vcmp.eq.s32.totalorder %v35, %v80
    %v86 = vsel %vm81, 1, 0
    %v87 = vsel %vm82, 1, 0
    %v88 = vsel %vm83, 1, 0
    %v89 = vsel %vm84, 1, 0
    %v90 = vsel %vm85, 1, 0
    %v91 = vcvt.s32.f32 %v86
    %v92 = vcvt.s32.f32 %v87
    %v93 = vcvt.s32.f32 %v88
    %v94 = vcvt.s32.f32 %v89
    %v95 = vcvt.s32.f32 %v90
    %v96 = vadd.f32 %v61, %v91
    %v97 = vadd.f32 %v62, %v92
    %v98 = vadd.f32 %v63, %v93
    %v99 = vadd.f32 %v64, %v94
    %v100 = vadd.f32 %v65, %v95
    %101 = vset.pattern.permute.xlu0 2
    %102 = vperm.xlu0 %101, %v29
    %v103 = vpop.permute.xlu0 %102
    %104 = vset.pattern.permute.xlu0 2
    %105 = vperm.xlu0 %104, %v30
    %v106 = vpop.permute.xlu0 %105
    %107 = vset.pattern.permute.xlu0 2
    %108 = vperm.xlu0 %107, %v31
    %v109 = vpop.permute.xlu0 %108
    %110 = vset.pattern.permute.xlu0 2
    %111 = vperm.xlu0 %110, %v32
    %v112 = vpop.permute.xlu0 %111
    %113 = vset.pattern.permute.xlu0 2
    %114 = vperm.xlu0 %113, %v33
    %v115 = vpop.permute.xlu0 %114
    %vm116 = vcmp.eq.s32.totalorder %v35, %v103
    %vm117 = vcmp.eq.s32.totalorder %v35, %v106
    %vm118 = vcmp.eq.s32.totalorder %v35, %v109
    %vm119 = vcmp.eq.s32.totalorder %v35, %v112
    %vm120 = vcmp.eq.s32.totalorder %v35, %v115
    %v121 = vsel %vm116, 1, 0
    %v122 = vsel %vm117, 1, 0
    %v123 = vsel %vm118, 1, 0
    %v124 = vsel %vm119, 1, 0
    %v125 = vsel %vm120, 1, 0
    %v126 = vcvt.s32.f32 %v121
    %v127 = vcvt.s32.f32 %v122
    %v128 = vcvt.s32.f32 %v123
    %v129 = vcvt.s32.f32 %v124
    %v130 = vcvt.s32.f32 %v125
    %v131 = vadd.f32 %v96, %v126
    %v132 = vadd.f32 %v97, %v127
    %v133 = vadd.f32 %v98, %v128
    %v134 = vadd.f32 %v99, %v129
    %v135 = vadd.f32 %v100, %v130
    %v136 = vld [vmem:[#allocation2] sm:$0xff]
    %v137 = vld [vmem:[#allocation2 + $0x8] sm:$0xff]
    %v138 = vld [vmem:[#allocation2 + $0x10] sm:$0xff]
    %v139 = vld [vmem:[#allocation2 + $0x18] sm:$0xff]
    %v140 = vld [vmem:[#allocation2 + $0x20] sm:$0xff]
    %v141 = vld [vmem:[#allocation2 + $0x28] sm:$0xff]
    %v142 = vld [vmem:[#allocation2 + $0x30] sm:$0xff]
    %v143 = vld [vmem:[#allocation2 + $0x38] sm:$0xff]
    %v144 = vld [vmem:[#allocation2 + $0x40] sm:$0xff]
    %v145 = vld [vmem:[#allocation2 + $0x48] sm:$0xff]
    %v146 = vld [vmem:[#allocation2 + $0x50] sm:$0xff]
    %v147 = vld [vmem:[#allocation2 + $0x58] sm:$0xff]
    %v148 = vld [vmem:[%s2] sm:$0x3]
    %v150 = vlaneseq
    %v151 = vshrl.u32 %v150, 7
    %v152 = vsub.s32 0, %v151
    %v153 = vrot.slane %v148, %v152
    %v154 = vlaneseq
    %v155 = vshrl.u32 %v154, 7
    %v156 = vsub.s32 1, %v155
    %v157 = vrot.slane %v148, %v156
    %vm160 = vcmask 392192
    %v162 = vsel %vm160, %v131, 0
    %v165 = vsel %vm160, %v132, 0
    %v168 = vsel %vm160, %v133, 0
    %v171 = vsel %vm160, %v134, 0
    %v174 = vsel %vm160, %v135, 0
    %176 = vmatprep.subr.mxu0 0.0
    %177 = vmatpush1.msra.mxu0 0.0
    %178 = vmatprep.subr.mxu0 0.0
    %179 = vmatpush1.msra.mxu0 0.0
    %180 = vmatprep.subr.mxu0 0.0
    %181 = vmatpush1.msra.mxu0 0.0
    %182 = vmatprep.subr.mxu0 0.0
    %183 = vmatpush1.msra.mxu0 0.0
    %184 = vmatprep.subr.mxu0 0.0
    %185 = vmatpush1.msra.mxu0 0.0
    %186 = vmatprep.subr.mxu0 0.0
    %187 = vmatpush1.msra.mxu0 0.0
    %188 = vmatprep.subr.mxu0 0.0
    %189 = vmatpush1.msra.mxu0 0.0
    %190 = vmatprep.subr.mxu0 0.0
    %191 = vmatpush1.msra.mxu0 0.0
    %192 = vmatprep.subr.mxu0 0.0
    %193 = vmatpush1.msra.mxu0 0.0
    %194 = vmatprep.subr.mxu0 0.0
    %195 = vmatpush1.msra.mxu0 0.0
    %196 = vmatprep.subr.mxu0 %v147
    %197 = vmatpush1.msra.mxu0 %v146
    %198 = vmatprep.subr.mxu0 %v145
    %199 = vmatpush1.msra.mxu0 %v144
    %200 = vmatprep.subr.mxu0 %v143
    %201 = vmatpush1.msra.mxu0 %v142
    %202 = vmatprep.subr.mxu0 %v141
    %203 = vmatpush1.msra.mxu0 %v140
    %204 = vmatprep.subr.mxu0 %v139
    %205 = vmatpush1.msra.mxu0 %v138
    %206 = vmatprep.subr.mxu0 %v137
    %207 = vmatpush1.msra.mxu0 %v136
    %208 = vmatprep.subr.mxu0 0.0
    %209 = vmatpush2.msra.mxu0 0.0
    %210 = vmatprep.subr.mxu0 0.0
    %211 = vmatpush2.msra.mxu0 0.0
    %212 = vmatprep.subr.mxu0 0.0
    %213 = vmatpush2.msra.mxu0 0.0
    %214 = vmatprep.subr.mxu0 0.0
    %215 = vmatpush2.msra.mxu0 0.0
    %216 = vmatprep.subr.mxu0 0.0
    %217 = vmatpush2.msra.mxu0 0.0
    %218 = vmatprep.subr.mxu0 0.0
    %219 = vmatpush2.msra.mxu0 0.0
    %220 = vmatprep.subr.mxu0 0.0
    %221 = vmatpush2.msra.mxu0 0.0
    %222 = vmatprep.subr.mxu0 0.0
    %223 = vmatpush2.msra.mxu0 0.0
    %224 = vmatprep.subr.mxu0 0.0
    %225 = vmatpush2.msra.mxu0 0.0
    %226 = vmatprep.subr.mxu0 0.0
    %227 = vmatpush2.msra.mxu0 0.0
    %228 = vmatprep.subr.mxu0 0.0
    %229 = vmatpush2.msra.mxu0 0.0
    %230 = vmatprep.subr.mxu0 0.0
    %231 = vmatpush2.msra.mxu0 0.0
    %232 = vmatprep.subr.mxu0 0.0
    %233 = vmatpush2.msra.mxu0 0.0
    %234 = vmatprep.subr.mxu0 0.0
    %235 = vmatpush2.msra.mxu0 0.0
    %236 = vmatprep.subr.mxu0 0.0
    %237 = vmatpush2.msra.mxu0 0.0
    %238 = vmatprep.subr.mxu0 0.0
    %239 = vmatpush2.msra.mxu0 0.0
    %240 = vmatprep.mubr.f32.mxu0 0.0
    %241 = vmatmul.mubr.f32.gmra.mxu0 %v162
    %v242 = vpop.f32.mrf.mxu0
    %v243 = vadd.f32 %v153, %v242
    %v244 = vpop.f32.mrf.mxu0
    %v245 = vadd.f32 %v157, %v244
    %246 = vmatprep.mubr.f32.mxu0 0.0
    %247 = vmatmul.mubr.f32.gmra.mxu0 %v165
    %v248 = vpop.f32.mrf.mxu0
    %v249 = vadd.f32 %v153, %v248
    %v250 = vpop.f32.mrf.mxu0
    %v251 = vadd.f32 %v157, %v250
    %252 = vmatprep.mubr.f32.mxu0 0.0
    %253 = vmatmul.mubr.f32.gmra.mxu0 %v168
    %v254 = vpop.f32.mrf.mxu0
    %v255 = vadd.f32 %v153, %v254
    %v256 = vpop.f32.mrf.mxu0
    %v257 = vadd.f32 %v157, %v256
    %258 = vmatprep.mubr.f32.mxu0 0.0
    %259 = vmatmul.mubr.f32.gmra.mxu0 %v171
    %v260 = vpop.f32.mrf.mxu0
    %v261 = vadd.f32 %v153, %v260
    %v262 = vpop.f32.mrf.mxu0
    %v263 = vadd.f32 %v157, %v262
    %264 = vmatprep.mubr.f32.mxu0 0.0
    %265 = vmatmul.mubr.f32.gmra.mxu0 %v174
    %v266 = vpop.f32.mrf.mxu0
    %v267 = vadd.f32 %v153, %v266
    %v268 = vpop.f32.mrf.mxu0
    %v269 = vadd.f32 %v157, %v268
    %270 = vdwg.mxu0
    %v271 = vxor.u32 %v245, 2147483648
    %v272 = vxor.u32 %v251, 2147483648
    %v273 = vxor.u32 %v257, 2147483648
    %v274 = vxor.u32 %v263, 2147483648
    %v275 = vxor.u32 %v269, 2147483648
    %v276 = vmul.f32 %v271, 1.442695
    %v277 = vpow.pop %v276
    %v278 = vmul.f32 %v272, 1.442695
    %v279 = vpow.pop %v278
    %v280 = vmul.f32 %v273, 1.442695
    %v281 = vpow.pop %v280
    %v282 = vmul.f32 %v274, 1.442695
    %v283 = vpow.pop %v282
    %v284 = vmul.f32 %v275, 1.442695
    %v285 = vpow.pop %v284
    %v286 = vadd.f32 %v277, 1.0
    %v287 = vadd.f32 %v279, 1.0
    %v288 = vadd.f32 %v281, 1.0
    %v289 = vadd.f32 %v283, 1.0
    %v290 = vadd.f32 %v285, 1.0
    %v291 = vrcp.pop %v286
    %v292 = vmul.f32 1.0, %v291
    %v293 = vrcp.pop %v287
    %v294 = vmul.f32 1.0, %v293
    %v295 = vrcp.pop %v288
    %v296 = vmul.f32 1.0, %v295
    %v297 = vrcp.pop %v289
    %v298 = vmul.f32 1.0, %v297
    %v299 = vrcp.pop %v290
    %v300 = vmul.f32 1.0, %v299
    %v301 = vmul.f32 %v243, %v292
    %v302 = vmul.f32 %v249, %v294
    %v303 = vmul.f32 %v255, %v296
    %v304 = vmul.f32 %v261, %v298
    %v305 = vmul.f32 %v267, %v300
    %vm306 = vcmask 523264
    %v307 = vsel %vm306, %v301, -inf
    %v308 = vrot.slane %v307, 4
    %v309 = vmax.f32 %v307, %v308
    %v310 = vrot.slane %v309, 2
    %v311 = vmax.f32 %v309, %v310
    %v312 = vrot.slane %v311, 1
    %v313 = vmax.f32 %v311, %v312
    %vm314 = vcmask 1047040
    %v315 = vsel %vm314, %v301, -inf
    %v316 = vrot.slane %v315, 4
    %v317 = vmax.f32 %v315, %v316
    %v318 = vrot.slane %v317, 2
    %v319 = vmax.f32 %v317, %v318
    %v320 = vrot.slane %v319, 1
    %v321 = vmax.f32 %v319, %v320
    %323 = vrot.lane.b32.xlu0 %v321, 64
    %v324 = vpop.permute.xlu0 %323
    %v326 = vmax.f32 %v313, %v324
    %vm327 = vcmask 523265
    %v328 = vsel %vm327, %v302, -inf
    %vm329 = vcmask 516096
    %v330 = vsel %vm329, %v303, -inf
    %v331 = vmax.f32 %v328, %v330
    %v332 = vrot.slane %v331, 4
    %v333 = vmax.f32 %v331, %v332
    %v334 = vrot.slane %v333, 2
    %v335 = vmax.f32 %v333, %v334
    %v336 = vrot.slane %v335, 1
    %v337 = vmax.f32 %v335, %v336
    %vm338 = vcmask 1048065
    %v339 = vsel %vm338, %v302, -inf
    %v340 = vrot.slane %v339, 4
    %v341 = vmax.f32 %v339, %v340
    %v342 = vrot.slane %v341, 2
    %v343 = vmax.f32 %v341, %v342
    %v344 = vrot.slane %v343, 1
    %v345 = vmax.f32 %v343, %v344
    %347 = vrot.lane.b32.xlu0 %v345, 64
    %v348 = vpop.permute.xlu0 %347
    %v350 = vmax.f32 %v337, %v348
    %vm351 = vcmask 523266
    %v352 = vsel %vm351, %v303, -inf
    %vm353 = vcmask 517120
    %v354 = vsel %vm353, %v304, -inf
    %v355 = vmax.f32 %v352, %v354
    %v356 = vrot.slane %v355, 4
    %v357 = vmax.f32 %v355, %v356
    %v358 = vrot.slane %v357, 2
    %v359 = vmax.f32 %v357, %v358
    %v360 = vrot.slane %v359, 1
    %v361 = vmax.f32 %v359, %v360
    %vm362 = vcmask 1048066
    %v363 = vsel %vm362, %v303, -inf
    %vm364 = vcmask 1040896
    %v365 = vsel %vm364, %v304, -inf
    %v366 = vmax.f32 %v363, %v365
    %v367 = vrot.slane %v366, 4
    %v368 = vmax.f32 %v366, %v367
    %v369 = vrot.slane %v368, 2
    %v370 = vmax.f32 %v368, %v369
    %v371 = vrot.slane %v370, 1
    %v372 = vmax.f32 %v370, %v371
    %374 = vrot.lane.b32.xlu0 %v372, 64
    %v375 = vpop.permute.xlu0 %374
    %v377 = vmax.f32 %v361, %v375
    %vm378 = vcmask 523267
    %v379 = vsel %vm378, %v304, -inf
    %vm380 = vcmask 518144
    %v381 = vsel %vm380, %v305, -inf
    %v382 = vmax.f32 %v379, %v381
    %v383 = vrot.slane %v382, 4
    %v384 = vmax.f32 %v382, %v383
    %v385 = vrot.slane %v384, 2
    %v386 = vmax.f32 %v384, %v385
    %v387 = vrot.slane %v386, 1
    %v388 = vmax.f32 %v386, %v387
    %vm389 = vcmask 1048067
    %v390 = vsel %vm389, %v304, -inf
    %vm391 = vcmask 1041920
    %v392 = vsel %vm391, %v305, -inf
    %v393 = vmax.f32 %v390, %v392
    %v394 = vrot.slane %v393, 4
    %v395 = vmax.f32 %v393, %v394
    %v396 = vrot.slane %v395, 2
    %v397 = vmax.f32 %v395, %v396
    %v398 = vrot.slane %v397, 1
    %v399 = vmax.f32 %v397, %v398
    %401 = vrot.lane.b32.xlu0 %v399, 64
    %v402 = vpop.permute.xlu0 %401
    %v404 = vmax.f32 %v388, %v402
    %v406 = vrot.slane %v350, 7
    %v409 = vrot.slane %v377, 6
    %v412 = vrot.slane %v404, 5
    %vm414 = vcmask 1040384
    %v415 = vsel %vm414, %v326, %v406
    %vm416 = vcmask 1041408
    %v417 = vsel %vm416, %v415, %v409
    %vm418 = vcmask 1042432
    %v419 = vsel %vm418, %v417, %v412
    %vm420 = vcmask 519168
    %421 = vst.msk [vmem:[#allocation5] sm:$0xf] %vm420, %v419
    // Predicated region
    $region18: #{tpu_custom_call.1} parent=1 // pred_check
      _
    $region19: #{tpu_custom_call.1} parent=1 // pred_check_branch
      %423 = sbr.rel (0) target = $region21
    $region20: #{tpu_custom_call.1} parent=1 // pred_region
      %s425 = ssub.s32 64, 64
      %426 = vsyncadd [#allocation4], %s425
      %s428 = sshll.u32 [#allocation5], 4
      %s429 = int_to_ptr.vmem [resolvable:$true] %s428
      %431 = dma.vmem_to_hbm [thread:$0]  %s429, 64, %s3, [#allocation4]
    $region21: #{tpu_custom_call.1} parent=1 // pred_fallthru
      _
    // Predicated region
    $region22: #{tpu_custom_call.1} parent=1 // pred_check
      _
    $region23: #{tpu_custom_call.1} parent=1 // pred_check_branch
      %433 = sbr.rel (0) target = $region25
    $region24: #{tpu_custom_call.1} parent=1 // pred_region
      %434 = dma.done [#allocation4], 64
    $region25: #{tpu_custom_call.1} parent=1 // pred_fallthru
      _
    %435 = vsyncpa [#allocation3], 1
    %436 = vsyncpa [#allocation4], 1

</llo_original>
